<compile_context>
chip_gen: v6e
topology: v6e:2x2x1
jax: 0.10.0
libtpu: 0.0.40
codegen_flags: <defaults>
</compile_context>

<pallas_src>
import functools

import jax
import jax.numpy as jnp
from jax.experimental import pallas as pl
from jax.experimental.pallas import tpu as pltpu


def _layernorm_kernel(x_ref, o_ref, *, eps, approx_reciprocal):
    # x_ref / o_ref: (tile_rows, hidden) VMEM tiles.
    x = x_ref[...].astype(jnp.float32)
    d = x.shape[-1]

    # Single fused pass: shift each row by its first element so the
    # sum / sum-of-squares variance stays numerically robust to large row
    # means, then let the two cross-lane reductions overlap on the XLU.
    y = x - x[:, 0:1]
    s = jnp.sum(y, axis=-1, keepdims=True)
    ss = jnp.sum(y * y, axis=-1, keepdims=True)

    mean_y = s * jnp.float32(1.0 / d)
    # Unbiased variance (Bessel's correction) to match torch.Tensor.std default.
    var = jnp.maximum(ss - s * mean_y, 0.0) / jnp.float32(d - 1)
    std = jnp.sqrt(var)

    # Column reciprocal (EUP) + full-tile multiply instead of full-tile divide.
    inv = pl.reciprocal(std + jnp.float32(eps), approx=approx_reciprocal)

    # (x - mean) == (y - mean_y): same centered value, computed from the shift.
    o_ref[...] = ((y - mean_y) * inv).astype(o_ref.dtype)


def _round_up(x, m):
    return ((x + m - 1) // m) * m


def _tpu_generation():
    """Best-effort chip query: (is_v7, per-core VMEM capacity in bytes)."""
    is_v7 = False
    try:
        kind = jax.devices()[0].device_kind.lower()
        is_v7 = ("v7" in kind) or ("7x" in kind)
    except Exception:
        pass
    vmem_cap = (64 << 20) if is_v7 else (128 << 20)
    try:
        cap = getattr(pltpu.get_tpu_info(), "vmem_capacity_bytes", None)
        if cap:
            vmem_cap = int(cap)
    except Exception:
        pass
    return is_v7, vmem_cap


def _layernorm_xla(x2d, eps):
    # Fallback for rows too wide for even a minimum-height VMEM tile.
    x32 = x2d.astype(jnp.float32)
    mean = jnp.mean(x32, axis=-1, keepdims=True)
    var = jnp.sum((x32 - mean) ** 2, axis=-1, keepdims=True) / (x32.shape[-1] - 1)
    return ((x32 - mean) / (jnp.sqrt(var) + eps)).astype(x2d.dtype)


def layer_normalization(x, eps=1e-6, approx_reciprocal=False):
    """Torch-style LayerNormalization (no weights) along the last axis."""
    orig_shape = x.shape
    d = orig_shape[-1]
    x2d = x.reshape(-1, d)
    rows = x2d.shape[0]

    dtype_bytes = jnp.dtype(x.dtype).itemsize
    # Sublane alignment: 8 rows for f32, 16 for bf16, 32 for int8/fp8.
    row_align = max(8, 32 // dtype_bytes)

    is_v7, vmem_cap = _tpu_generation()
    vmem_ceiling = (3 * vmem_cap) // 4  # headroom for Mosaic internal scratch

    # Tile sized against the f32 footprint of the upcast working set
    # (~2 MiB on v7x, ~4 MiB on v5e/v6e), rounded to the sublane alignment and
    # clamped to the (aligned) number of rows.
    target_f32_bytes = (2 << 20) if is_v7 else (4 << 20)
    tile_rows = target_f32_bytes // max(d * 4, 1)
    tile_rows = max(row_align, (tile_rows // row_align) * row_align)
    tile_rows = min(tile_rows, _round_up(rows, row_align))
    if is_v7:
        # Keep >= 2 grid steps so "parallel" has work for both v7x TensorCores.
        two_step = max(row_align, _round_up(pl.cdiv(rows, 2), row_align))
        tile_rows = min(tile_rows, two_step)

    def _budget(tr):
        tile_bytes = tr * d * dtype_bytes
        f32_temps = 3 * tr * d * 4            # f32 upcast + shifted y + y*y temps
        b = 2 * 2 * tile_bytes + f32_temps    # double-buffered in + out tiles
        return b + b // 4                     # 25% slack

    # Wide-row guard: if even the minimum tile cannot fit, use plain XLA.
    # TODO(synk): lane-chunked (two-level) reduction for d in the 100K+ range.
    if _budget(row_align) > vmem_ceiling:
        return _layernorm_xla(x2d, eps).reshape(orig_shape)

    # Shrink the tile if needed so the requested VMEM stays under the ceiling.
    while tile_rows > row_align and _budget(tile_rows) > vmem_ceiling:
        tile_rows = max(row_align, ((tile_rows // 2) // row_align) * row_align)

    grid = (pl.cdiv(rows, tile_rows),)
    vmem_limit = int(min(max(_budget(tile_rows), 16 << 20), vmem_ceiling))

    cost = pl.CostEstimate(
        flops=7 * rows * d,
        transcendentals=2 * rows,            # sqrt + reciprocal per row
        bytes_accessed=2 * rows * d * dtype_bytes,
    )

    # NOTE: pipeline_mode=pl.Buffered(3) on the input spec is a possible extra
    # win on v7x at these small tiles; left at the default 2-deep buffering.
    out = pl.pallas_call(
        functools.partial(
            _layernorm_kernel, eps=eps, approx_reciprocal=approx_reciprocal
        ),
        out_shape=jax.ShapeDtypeStruct((rows, d), x.dtype),
        grid=grid,
        in_specs=[pl.BlockSpec((tile_rows, d), lambda i: (i, 0))],
        out_specs=pl.BlockSpec((tile_rows, d), lambda i: (i, 0)),
        compiler_params=pltpu.CompilerParams(
            dimension_semantics=("parallel",),
            vmem_limit_bytes=vmem_limit,
        ),
        cost_estimate=cost,
    )(x2d)

    return out.reshape(orig_shape)


def _reference(x, eps):
    x32 = x.astype(jnp.float32)
    mean = jnp.mean(x32, axis=-1, keepdims=True)
    var = jnp.sum((x32 - mean) ** 2, axis=-1, keepdims=True) / (x.shape[-1] - 1)
    return ((x32 - mean) / (jnp.sqrt(var) + eps)).astype(x.dtype)


if __name__ == "__main__":
    key = jax.random.PRNGKey(0)

    # Small transformer-ish shape; hidden=128 keeps the lane dim dense.
    x = jax.random.normal(key, (2, 8, 128), dtype=jnp.float32)
    y = jax.block_until_ready(layer_normalization(x, eps=1e-6))
    ref = _reference(x, 1e-6)
    assert y.shape == x.shape and y.dtype == x.dtype
    assert jnp.allclose(y, ref, atol=1e-5, rtol=1e-5), "mismatch vs reference"

    # Row count not a multiple of the tile: exercises the masked edge block
    # (no wrapper-side padding).
    x2 = jax.random.normal(jax.random.PRNGKey(1), (3, 5, 128), dtype=jnp.float32)
    y2 = jax.block_until_ready(layer_normalization(x2, eps=1e-6))
    ref2 = _reference(x2, 1e-6)
    assert y2.shape == x2.shape and y2.dtype == x2.dtype
    assert jnp.allclose(y2, ref2, atol=1e-5, rtol=1e-5), "mismatch (ragged rows)"

    # Narrow hidden dim (full-extent lane block, not a multiple of 128), with a
    # nonzero mean offset to exercise the shifted fused-variance path.
    x3 = 3.0 + jax.random.normal(jax.random.PRNGKey(2), (4, 8, 32), dtype=jnp.float32)
    y3 = jax.block_until_ready(layer_normalization(x3, eps=1e-6))
    ref3 = _reference(x3, 1e-6)
    assert y3.shape == x3.shape and y3.dtype == x3.dtype
    assert jnp.allclose(y3, ref3, atol=1e-5, rtol=1e-5), "mismatch (hidden=32)"

    print("KERNEL_OK")
</pallas_src>

<mosaic_0001>
module attributes {stable_mosaic.version = 11 : i64} {
  func.func @_layernorm_kernel(%arg0: i32, %arg1: memref<16x128xf32, #tpu.memory_space<vmem>>, %arg2: memref<16x128xf32, #tpu.memory_space<vmem>>) attributes {dimension_semantics = [#tpu.dimension_semantics<parallel>], iteration_bounds = array<i64: 1>, scalar_prefetch = 0 : i64, scratch_operands = 0 : i64, tpu.core_type = #tpu.core_type<tc>, window_params = [{transform_indices = @transform_0, window_bounds = array<i64: 16, 128>}, {transform_indices = @transform_1, window_bounds = array<i64: 16, 128>}]} {
    %c0 = arith.constant 0 : index
    %c0_0 = arith.constant 0 : index
    %0 = vector.load %arg1[%c0, %c0_0] : memref<16x128xf32, #tpu.memory_space<vmem>>, vector<16x128xf32>
    %1 = vector.extract_strided_slice %0 {offsets = [0, 0], sizes = [16, 1], strides = [1, 1]} : vector<16x128xf32> to vector<16x1xf32>
    %2 = vector.broadcast %1 : vector<16x1xf32> to vector<16x128xf32>
    %3 = arith.subf %0, %2 : vector<16x128xf32>
    %cst = arith.constant dense<0.000000e+00> : vector<16xf32>
    %4 = vector.multi_reduction <add>, %3, %cst [1] : vector<16x128xf32> to vector<16xf32>
    %5 = vector.shape_cast %4 : vector<16xf32> to vector<16x1xf32>
    %6 = arith.mulf %3, %3 : vector<16x128xf32>
    %cst_1 = arith.constant dense<0.000000e+00> : vector<16xf32>
    %7 = vector.multi_reduction <add>, %6, %cst_1 [1] : vector<16x128xf32> to vector<16xf32>
    %8 = vector.shape_cast %7 : vector<16xf32> to vector<16x1xf32>
    %cst_2 = arith.constant 7.812500e-03 : f32
    %9 = vector.broadcast %cst_2 : f32 to vector<16x1xf32>
    %10 = arith.mulf %5, %9 : vector<16x1xf32>
    %11 = arith.mulf %5, %10 : vector<16x1xf32>
    %12 = arith.subf %8, %11 : vector<16x1xf32>
    %cst_3 = arith.constant 0.000000e+00 : f32
    %13 = vector.broadcast %cst_3 : f32 to vector<16x1xf32>
    %14 = arith.maximumf %12, %13 : vector<16x1xf32>
    %cst_4 = arith.constant 1.270000e+02 : f32
    %15 = vector.broadcast %cst_4 : f32 to vector<16x1xf32>
    %16 = arith.divf %14, %15 : vector<16x1xf32>
    %17 = math.sqrt %16 : vector<16x1xf32>
    %cst_5 = arith.constant 9.99999997E-7 : f32
    %18 = vector.broadcast %cst_5 : f32 to vector<16x1xf32>
    %19 = arith.addf %17, %18 : vector<16x1xf32>
    %20 = tpu.reciprocal %19 : vector<16x1xf32> -> vector<16x1xf32>
    %21 = vector.broadcast %10 : vector<16x1xf32> to vector<16x128xf32>
    %22 = arith.subf %3, %21 : vector<16x128xf32>
    %23 = vector.broadcast %20 : vector<16x1xf32> to vector<16x128xf32>
    %24 = arith.mulf %22, %23 : vector<16x128xf32>
    %c0_6 = arith.constant 0 : index
    %c0_7 = arith.constant 0 : index
    %25 = vector.load %arg2[%c0_6, %c0_7] : memref<16x128xf32, #tpu.memory_space<vmem>>, vector<16x128xf32>
    tpu.vector_store %arg2[%c0_6, %c0_7], %24 {strides = array<i32>} : memref<16x128xf32, #tpu.memory_space<vmem>>, vector<16x128xf32>,
    return
  }
  func.func @transform_0(%arg0: i32) -> (i32, i32) {
    %c0_i32 = arith.constant 0 : i32
    %c0_i32_0 = arith.constant 0 : i32
    return %arg0, %c0_i32 : i32, i32
  }
  func.func @transform_1(%arg0: i32) -> (i32, i32) {
    %c0_i32 = arith.constant 0 : i32
    %c0_i32_0 = arith.constant 0 : i32
    return %arg0, %c0_i32 : i32, i32
  }
}

</mosaic_0001>

<llo_original>
// kernel: tpu_custom_call.1
$region0: #{tpu_custom_call.1}
  #allocation0 [shape = 'u32[]', space=smem, size = 0x4, offset = 0x4, fixed_abs, tag = 'smem constant byte address 0x4 - core index']
  #allocation1 [shape = 'u32[144,128]{1,0:T(1,128)}', space=vmem, size = 0x12000, scoped, tag = 'internal scratch']
  %s0 = inlined_call_operand.hbm [shape: f32[16,128], index: 0, kind: input, shape index: {}]
  %s1 = inlined_call_operand.hbm [shape: f32[16,128], index: 1, kind: output, shape index: {}]
  %s2 = sld [smem:[#allocation0]]
  $region18: #{tpu_custom_call.1} parent=0
    _
  %s4 = ssub.s32 1, %s2
  %s5 = scalar_select 0, %s4, %s2
  $region1: #{tpu_custom_call.1} parent=0
    #allocation2 [shape = 'u8[8192]{0}', space=vmem, size = 0x2000, scoped, tag = 'input window, operand 0, single buffered']
    #allocation3 [shape = 's32[1]{0}', space=sflag, size = 0x4, scoped, tag = 'scoped memory for tpu_custom_call.1']
    #allocation4 [shape = 's32[1]{0}', space=sflag, size = 0x4, scoped, tag = 'scoped memory for tpu_custom_call.1']
    #allocation5 [shape = 'u8[8192]{0}', space=vmem, size = 0x2000, scoped, tag = 'output window, operand 0, single buffered']
    %6 = vsyncpa [#allocation3], 0
    %7 = vsyncpa [#allocation4], 0
    // Predicated region
    $region2: #{tpu_custom_call.1} parent=1 // pred_check
      _
    $region3: #{tpu_custom_call.1} parent=1 // pred_check_branch
      %9 = sbr.rel (0) target = $region5
    $region4: #{tpu_custom_call.1} parent=1 // pred_region
      %s11 = ssub.s32 256, 256
      %12 = vsyncadd [#allocation3], %s11
      %s13 = sshll.u32 [#allocation2], 4
      %s14 = int_to_ptr.vmem [resolvable:$true] %s13
      %19 = dma.hbm_to_vmem [thread:$0]  %s0, 256, %s14, [#allocation3], 128, 128, 8
    $region5: #{tpu_custom_call.1} parent=1 // pred_fallthru
      _
    // Predicated region
    $region6: #{tpu_custom_call.1} parent=1 // pred_check
      _
    $region7: #{tpu_custom_call.1} parent=1 // pred_check_branch
      %21 = sbr.rel (0) target = $region9
    $region8: #{tpu_custom_call.1} parent=1 // pred_region
      %22 = dma.done [#allocation3], 256
    $region9: #{tpu_custom_call.1} parent=1 // pred_fallthru
      _
    %v23 = vld [vmem:[#allocation2] sm:$0xff]
    %v24 = vld [vmem:[#allocation2 + $0x8] sm:$0xff]
    %26 = vset.pattern.permute.xlu0 0
    %27 = vperm.xlu0 %26, %v23
    %v28 = vpop.permute.xlu0 %27
    %31 = vset.pattern.permute.xlu0 0
    %32 = vperm.xlu0 %31, %v24
    %v33 = vpop.permute.xlu0 %32
    %v35 = vsub.f32 %v23, %v28
    %v36 = vsub.f32 %v24, %v33
    %37 = vadd.xlane.f32.xlu0 %v35
    %v38 = vpop.xlane.xlu0 %37
    %39 = vadd.xlane.f32.xlu0 %v36
    %v40 = vpop.xlane.xlu0 %39
    %v41 = vmul.f32 %v35, %v35
    %v42 = vmul.f32 %v36, %v36
    %43 = vadd.xlane.f32.xlu0 %v41
    %v44 = vpop.xlane.xlu0 %43
    %45 = vadd.xlane.f32.xlu0 %v42
    %v46 = vpop.xlane.xlu0 %45
    %v47 = vmul.f32 %v38, 0.0078125
    %v48 = vmul.f32 %v40, 0.0078125
    %v49 = vmul.f32 %v38, %v47
    %v50 = vmul.f32 %v40, %v48
    %v51 = vsub.f32 %v44, %v49
    %v52 = vsub.f32 %v46, %v50
    %v53 = vmax.f32 %v51, 0.0
    %v54 = vmax.f32 %v52, 0.0
    %v55 = vrcp.pop 127.0
    %v56 = vmul.f32 %v53, %v55
    %v57 = vmul.f32 %v54, %v55
    %v58 = vrsqrt.pop %v56
    %v59 = vmul.f32 %v56, %v58
    %vm60 = vcmp.eq.f32.partialorder %v56, inf
    %v61 = vsel %vm60, %v56, %v59
    %vm62 = vcmp.eq.f32.partialorder %v56, 0.0
    %v63 = vand.u32 %v56, 2147483648
    %v64 = vsel %vm62, %v63, %v61
    %v65 = vrsqrt.pop %v57
    %v66 = vmul.f32 %v57, %v65
    %vm67 = vcmp.eq.f32.partialorder %v57, inf
    %v68 = vsel %vm67, %v57, %v66
    %vm69 = vcmp.eq.f32.partialorder %v57, 0.0
    %v70 = vand.u32 %v57, 2147483648
    %v71 = vsel %vm69, %v70, %v68
    %v72 = vadd.f32 %v64, 1e-06
    %v73 = vadd.f32 %v71, 1e-06
    %v74 = vrcp.pop %v72
    %v75 = vrcp.pop %v73
    %v76 = vsub.f32 %v35, %v47
    %v77 = vsub.f32 %v36, %v48
    %v78 = vmul.f32 %v76, %v74
    %v79 = vmul.f32 %v77, %v75
    %80 = vst [vmem:[#allocation5] sm:$0xff] %v78
    %81 = vst [vmem:[#allocation5 + $0x8] sm:$0xff] %v79
    // Predicated region
    $region10: #{tpu_custom_call.1} parent=1 // pred_check
      _
    $region11: #{tpu_custom_call.1} parent=1 // pred_check_branch
      %83 = sbr.rel (0) target = $region13
    $region12: #{tpu_custom_call.1} parent=1 // pred_region
      %s85 = ssub.s32 256, 256
      %86 = vsyncadd [#allocation4], %s85
      %s87 = sshll.u32 [#allocation5], 4
      %s88 = int_to_ptr.vmem [resolvable:$true] %s87
      %93 = dma.vmem_to_hbm [thread:$0]  %s88, 256, %s1, [#allocation4], 128, 128, 8
    $region13: #{tpu_custom_call.1} parent=1 // pred_fallthru
      _
    // Predicated region
    $region14: #{tpu_custom_call.1} parent=1 // pred_check
      _
    $region15: #{tpu_custom_call.1} parent=1 // pred_check_branch
      %95 = sbr.rel (0) target = $region17
    $region16: #{tpu_custom_call.1} parent=1 // pred_region
      %96 = dma.done [#allocation4], 256
    $region17: #{tpu_custom_call.1} parent=1 // pred_fallthru
      _
    %97 = vsyncpa [#allocation3], 1
    %98 = vsyncpa [#allocation4], 1

</llo_original>
